<compile_context>
chip_gen: v5e
topology: v5e:2x2
jax: 0.10.0
libtpu: 0.0.40
codegen_flags: <defaults>
</compile_context>

<pallas_src>
import jax
import jax.numpy as jnp
from jax.experimental import pallas as pl
from jax.experimental.pallas import tpu as pltpu


def _round_up(a, m):
    return ((a + m - 1) // m) * m


def _make_kernel(hidden, offs, tile_r, chunk):
    W1, B1, W2, B2, W3, B3, W4, B4 = offs   # offsets into the packed param vector

    def kernel(p_ref, x_ref, o_ref):
        # ---- hoist all scalar weight loads (loop invariant; SMEM/sreg traffic is
        #      negligible next to the vector work and avoids re-materialized
        #      broadcast vregs inside the chunk loop) ----
        w1 = [(p_ref[W1 + 2 * j], p_ref[W1 + 2 * j + 1]) for j in range(hidden)]
        b1 = [p_ref[B1 + j] for j in range(hidden)]
        w2 = [(p_ref[W2 + j], p_ref[W2 + hidden + j]) for j in range(hidden)]
        b2 = (p_ref[B2], p_ref[B2 + 1])
        w3 = [(p_ref[W3 + 2 * j], p_ref[W3 + 2 * j + 1]) for j in range(hidden)]
        b3 = [p_ref[B3 + j] for j in range(hidden)]
        w4 = [(p_ref[W4 + j], p_ref[W4 + hidden + j]) for j in range(hidden)]
        b4 = (p_ref[B4], p_ref[B4 + 1])

        lane = jax.lax.broadcasted_iota(jnp.int32, (chunk, 128), 1)
        is_even = (lane & 1) == 0

        def two_layers(f0, f1, w_in, b_in, w_out, b_out):
            # Linear(2->hidden) -> ReLU -> Linear(hidden->2), fused so only the two
            # running accumulators plus one hidden slab are live at any time.
            a0 = None
            a1 = None
            for j in range(hidden):            # static unroll (hidden is tiny)
                h = jnp.maximum(w_in[j][0] * f0 + w_in[j][1] * f1 + b_in[j], 0.0)
                a0 = w_out[j][0] * h if a0 is None else a0 + w_out[j][0] * h
                a1 = w_out[j][1] * h if a1 is None else a1 + w_out[j][1] * h
            return a0 + b_out[0], a1 + b_out[1]

        def body(c, carry):
            r0 = pl.multiple_of(c * chunk, chunk)
            xi = x_ref[pl.ds(r0, chunk), :]           # even lanes: x0, odd lanes: x1
            xs = pltpu.roll(xi, shift=127, axis=1)    # xs[l] = xi[(l+1)%128] -> x1 on even lanes
            # even lanes compute real samples; odd lanes compute finite don't-cares
            e0, e1 = two_layers(xi, xs, w1, b1, w2, b2)    # encoder
            p0, p1 = two_layers(e0, e1, w3, b3, w4, b4)    # projection head
            # F.normalize: p * rsqrt(max(||p||^2, eps^2)) == p / max(||p||, 1e-12)
            inv = jax.lax.rsqrt(jnp.maximum(p0 * p0 + p1 * p1, 1e-24))
            q0 = p0 * inv
            q1 = p1 * inv
            # re-interleave: lane 2k <- q0[2k], lane 2k+1 <- q1[2k]
            o_ref[pl.ds(r0, chunk), :] = jnp.where(
                is_even, q0, pltpu.roll(q1, shift=1, axis=1))
            return carry

        jax.lax.fori_loop(0, tile_r // chunk, body, 0)

    return kernel


def contrastive_forward(x, params, *, block_rows=256, chunk_rows=8):
    """x: (B, 2) float. params: torch-style w (out,in) / b (out,). Returns (B, 2)."""
    B, in_dim = x.shape
    hidden = int(params["w1"].shape[0])
    out_dim = int(params["w4"].shape[0])
    if in_dim != 2 or out_dim != 2:
        # TODO(synk): lane-interleave trick is specialized to the module defaults
        # input_size == output_size == 2; other sizes need a different swizzle.
        raise NotImplementedError("kernel specialized to input_size=output_size=2")
    assert chunk_rows % 8 == 0 and block_rows % chunk_rows == 0

    x = x.astype(jnp.float32)

    # ---- pack all weights/biases into one small SMEM-resident scalar vector ----
    pieces = [params["w1"], params["b1"], params["w2"], params["b2"],
              params["w3"], params["b3"], params["w4"], params["b4"]]
    offs, o = [], 0
    for p in pieces:
        offs.append(o)
        o += int(p.size)
    flat = jnp.concatenate([jnp.ravel(p).astype(jnp.float32) for p in pieces])

    # ---- lane-interleaved view: (B,2) row-major --free bitcast--> (rows,128) ----
    rows_needed = pl.cdiv(B, 64)                 # 64 samples (128 f32) per lane row
    n_blocks = pl.cdiv(rows_needed, block_rows)
    if n_blocks == 1 and rows_needed >= 2 * chunk_rows:
        n_blocks = 2                             # >=2 grid steps so v7x dual-TC shares work
    tile_r = _round_up(pl.cdiv(rows_needed, n_blocks), chunk_rows)
    rows = n_blocks * tile_r
    Bp = rows * 64
    if Bp != B:
        # small tail pad only; all math is per-sample so padded lanes never mix
        # with real ones and are sliced off below.
        x = jnp.pad(x, ((0, Bp - B), (0, 0)))
    x_lanes = x.reshape(rows, 128)

    kernel = _make_kernel(hidden, tuple(offs), tile_r, chunk_rows)

    out = pl.pallas_call(
        kernel,
        out_shape=jax.ShapeDtypeStruct((rows, 128), jnp.float32),
        grid=(n_blocks,),
        in_specs=[
            pl.BlockSpec(memory_space=pltpu.MemorySpace.SMEM),    # packed scalars
            pl.BlockSpec((tile_r, 128), lambda i: (i, 0)),        # lane-dense input block
        ],
        out_specs=pl.BlockSpec((tile_r, 128), lambda i: (i, 0)),  # lane-dense output block
        compiler_params=pltpu.CompilerParams(
            dimension_semantics=("parallel",)),
    )(flat, x_lanes)

    out = out.reshape(Bp, 2)                     # free bitcast back to (B, 2)
    return out if Bp == B else out[:B]


def init_params(key, input_size=2, hidden_size=10, output_size=2):
    """PyTorch-style Linear init: uniform +/- 1/sqrt(fan_in); W is (out, in)."""
    ks = jax.random.split(key, 8)

    def lin(kw, kb, fan_in, fan_out):
        bound = 1.0 / jnp.sqrt(jnp.float32(fan_in))
        w = jax.random.uniform(kw, (fan_out, fan_in), jnp.float32, -bound, bound)
        b = jax.random.uniform(kb, (fan_out,), jnp.float32, -bound, bound)
        return w, b

    w1, b1 = lin(ks[0], ks[1], input_size, hidden_size)
    w2, b2 = lin(ks[2], ks[3], hidden_size, output_size)
    w3, b3 = lin(ks[4], ks[5], output_size, hidden_size)
    w4, b4 = lin(ks[6], ks[7], hidden_size, output_size)
    return dict(w1=w1, b1=b1, w2=w2, b2=b2, w3=w3, b3=b3, w4=w4, b4=b4)


def reference_forward(x, p):
    # exact-f32 reference (matches PyTorch f32 semantics)
    hp = jax.lax.Precision.HIGHEST
    h = jnp.maximum(jnp.dot(x, p["w1"].T, precision=hp) + p["b1"], 0.0)
    enc = jnp.dot(h, p["w2"].T, precision=hp) + p["b2"]
    h2 = jnp.maximum(jnp.dot(enc, p["w3"].T, precision=hp) + p["b3"], 0.0)
    proj = jnp.dot(h2, p["w4"].T, precision=hp) + p["b4"]
    norm = jnp.sqrt(jnp.sum(proj * proj, axis=1, keepdims=True))
    return proj / jnp.maximum(norm, 1e-12)


if __name__ == "__main__":
    key = jax.random.PRNGKey(0)
    kx, kp = jax.random.split(key)

    batch, input_size, hidden_size, output_size = 200, 2, 10, 2
    x = jax.random.normal(kx, (batch, input_size), jnp.float32)
    params = init_params(kp, input_size, hidden_size, output_size)

    out = jax.block_until_ready(contrastive_forward(x, params))

    ref = reference_forward(x, params)
    assert out.shape == (batch, output_size)
    err = float(jnp.max(jnp.abs(out - ref)))
    assert jnp.allclose(out, ref, atol=1e-5, rtol=1e-5), err

    print("KERNEL_OK")
</pallas_src>

<mosaic_0001>
module attributes {stable_mosaic.version = 11 : i64} {
  func.func @kernel(%arg0: i32, %arg1: memref<104xf32, #tpu.memory_space<smem>>, %arg2: memref<8x128xf32, #tpu.memory_space<vmem>>, %arg3: memref<8x128xf32, #tpu.memory_space<vmem>>) attributes {dimension_semantics = [#tpu.dimension_semantics<parallel>], iteration_bounds = array<i64: 1>, scalar_prefetch = 0 : i64, scratch_operands = 0 : i64, tpu.core_type = #tpu.core_type<tc>, window_params = [{transform_indices = @transform_0, window_bounds = array<i64: 104>}, {transform_indices = @transform_1, window_bounds = array<i64: 8, 128>}, {transform_indices = @transform_2, window_bounds = array<i64: 8, 128>}]} {
    %c0 = arith.constant 0 : index
    %0 = memref.load %arg1[%c0] : memref<104xf32, #tpu.memory_space<smem>>
    %c1 = arith.constant 1 : index
    %1 = memref.load %arg1[%c1] : memref<104xf32, #tpu.memory_space<smem>>
    %c2 = arith.constant 2 : index
    %2 = memref.load %arg1[%c2] : memref<104xf32, #tpu.memory_space<smem>>
    %c3 = arith.constant 3 : index
    %3 = memref.load %arg1[%c3] : memref<104xf32, #tpu.memory_space<smem>>
    %c4 = arith.constant 4 : index
    %4 = memref.load %arg1[%c4] : memref<104xf32, #tpu.memory_space<smem>>
    %c5 = arith.constant 5 : index
    %5 = memref.load %arg1[%c5] : memref<104xf32, #tpu.memory_space<smem>>
    %c6 = arith.constant 6 : index
    %6 = memref.load %arg1[%c6] : memref<104xf32, #tpu.memory_space<smem>>
    %c7 = arith.constant 7 : index
    %7 = memref.load %arg1[%c7] : memref<104xf32, #tpu.memory_space<smem>>
    %c8 = arith.constant 8 : index
    %8 = memref.load %arg1[%c8] : memref<104xf32, #tpu.memory_space<smem>>
    %c9 = arith.constant 9 : index
    %9 = memref.load %arg1[%c9] : memref<104xf32, #tpu.memory_space<smem>>
    %c10 = arith.constant 10 : index
    %10 = memref.load %arg1[%c10] : memref<104xf32, #tpu.memory_space<smem>>
    %c11 = arith.constant 11 : index
    %11 = memref.load %arg1[%c11] : memref<104xf32, #tpu.memory_space<smem>>
    %c12 = arith.constant 12 : index
    %12 = memref.load %arg1[%c12] : memref<104xf32, #tpu.memory_space<smem>>
    %c13 = arith.constant 13 : index
    %13 = memref.load %arg1[%c13] : memref<104xf32, #tpu.memory_space<smem>>
    %c14 = arith.constant 14 : index
    %14 = memref.load %arg1[%c14] : memref<104xf32, #tpu.memory_space<smem>>
    %c15 = arith.constant 15 : index
    %15 = memref.load %arg1[%c15] : memref<104xf32, #tpu.memory_space<smem>>
    %c16 = arith.constant 16 : index
    %16 = memref.load %arg1[%c16] : memref<104xf32, #tpu.memory_space<smem>>
    %c17 = arith.constant 17 : index
    %17 = memref.load %arg1[%c17] : memref<104xf32, #tpu.memory_space<smem>>
    %c18 = arith.constant 18 : index
    %18 = memref.load %arg1[%c18] : memref<104xf32, #tpu.memory_space<smem>>
    %c19 = arith.constant 19 : index
    %19 = memref.load %arg1[%c19] : memref<104xf32, #tpu.memory_space<smem>>
    %c20 = arith.constant 20 : index
    %20 = memref.load %arg1[%c20] : memref<104xf32, #tpu.memory_space<smem>>
    %c21 = arith.constant 21 : index
    %21 = memref.load %arg1[%c21] : memref<104xf32, #tpu.memory_space<smem>>
    %c22 = arith.constant 22 : index
    %22 = memref.load %arg1[%c22] : memref<104xf32, #tpu.memory_space<smem>>
    %c23 = arith.constant 23 : index
    %23 = memref.load %arg1[%c23] : memref<104xf32, #tpu.memory_space<smem>>
    %c24 = arith.constant 24 : index
    %24 = memref.load %arg1[%c24] : memref<104xf32, #tpu.memory_space<smem>>
    %c25 = arith.constant 25 : index
    %25 = memref.load %arg1[%c25] : memref<104xf32, #tpu.memory_space<smem>>
    %c26 = arith.constant 26 : index
    %26 = memref.load %arg1[%c26] : memref<104xf32, #tpu.memory_space<smem>>
    %c27 = arith.constant 27 : index
    %27 = memref.load %arg1[%c27] : memref<104xf32, #tpu.memory_space<smem>>
    %c28 = arith.constant 28 : index
    %28 = memref.load %arg1[%c28] : memref<104xf32, #tpu.memory_space<smem>>
    %c29 = arith.constant 29 : index
    %29 = memref.load %arg1[%c29] : memref<104xf32, #tpu.memory_space<smem>>
    %c30 = arith.constant 30 : index
    %30 = memref.load %arg1[%c30] : memref<104xf32, #tpu.memory_space<smem>>
    %c40 = arith.constant 40 : index
    %31 = memref.load %arg1[%c40] : memref<104xf32, #tpu.memory_space<smem>>
    %c31 = arith.constant 31 : index
    %32 = memref.load %arg1[%c31] : memref<104xf32, #tpu.memory_space<smem>>
    %c41 = arith.constant 41 : index
    %33 = memref.load %arg1[%c41] : memref<104xf32, #tpu.memory_space<smem>>
    %c32 = arith.constant 32 : index
    %34 = memref.load %arg1[%c32] : memref<104xf32, #tpu.memory_space<smem>>
    %c42 = arith.constant 42 : index
    %35 = memref.load %arg1[%c42] : memref<104xf32, #tpu.memory_space<smem>>
    %c33 = arith.constant 33 : index
    %36 = memref.load %arg1[%c33] : memref<104xf32, #tpu.memory_space<smem>>
    %c43 = arith.constant 43 : index
    %37 = memref.load %arg1[%c43] : memref<104xf32, #tpu.memory_space<smem>>
    %c34 = arith.constant 34 : index
    %38 = memref.load %arg1[%c34] : memref<104xf32, #tpu.memory_space<smem>>
    %c44 = arith.constant 44 : index
    %39 = memref.load %arg1[%c44] : memref<104xf32, #tpu.memory_space<smem>>
    %c35 = arith.constant 35 : index
    %40 = memref.load %arg1[%c35] : memref<104xf32, #tpu.memory_space<smem>>
    %c45 = arith.constant 45 : index
    %41 = memref.load %arg1[%c45] : memref<104xf32, #tpu.memory_space<smem>>
    %c36 = arith.constant 36 : index
    %42 = memref.load %arg1[%c36] : memref<104xf32, #tpu.memory_space<smem>>
    %c46 = arith.constant 46 : index
    %43 = memref.load %arg1[%c46] : memref<104xf32, #tpu.memory_space<smem>>
    %c37 = arith.constant 37 : index
    %44 = memref.load %arg1[%c37] : memref<104xf32, #tpu.memory_space<smem>>
    %c47 = arith.constant 47 : index
    %45 = memref.load %arg1[%c47] : memref<104xf32, #tpu.memory_space<smem>>
    %c38 = arith.constant 38 : index
    %46 = memref.load %arg1[%c38] : memref<104xf32, #tpu.memory_space<smem>>
    %c48 = arith.constant 48 : index
    %47 = memref.load %arg1[%c48] : memref<104xf32, #tpu.memory_space<smem>>
    %c39 = arith.constant 39 : index
    %48 = memref.load %arg1[%c39] : memref<104xf32, #tpu.memory_space<smem>>
    %c49 = arith.constant 49 : index
    %49 = memref.load %arg1[%c49] : memref<104xf32, #tpu.memory_space<smem>>
    %c50 = arith.constant 50 : index
    %50 = memref.load %arg1[%c50] : memref<104xf32, #tpu.memory_space<smem>>
    %c51 = arith.constant 51 : index
    %51 = memref.load %arg1[%c51] : memref<104xf32, #tpu.memory_space<smem>>
    %c52 = arith.constant 52 : index
    %52 = memref.load %arg1[%c52] : memref<104xf32, #tpu.memory_space<smem>>
    %c53 = arith.constant 53 : index
    %53 = memref.load %arg1[%c53] : memref<104xf32, #tpu.memory_space<smem>>
    %c54 = arith.constant 54 : index
    %54 = memref.load %arg1[%c54] : memref<104xf32, #tpu.memory_space<smem>>
    %c55 = arith.constant 55 : index
    %55 = memref.load %arg1[%c55] : memref<104xf32, #tpu.memory_space<smem>>
    %c56 = arith.constant 56 : index
    %56 = memref.load %arg1[%c56] : memref<104xf32, #tpu.memory_space<smem>>
    %c57 = arith.constant 57 : index
    %57 = memref.load %arg1[%c57] : memref<104xf32, #tpu.memory_space<smem>>
    %c58 = arith.constant 58 : index
    %58 = memref.load %arg1[%c58] : memref<104xf32, #tpu.memory_space<smem>>
    %c59 = arith.constant 59 : index
    %59 = memref.load %arg1[%c59] : memref<104xf32, #tpu.memory_space<smem>>
    %c60 = arith.constant 60 : index
    %60 = memref.load %arg1[%c60] : memref<104xf32, #tpu.memory_space<smem>>
    %c61 = arith.constant 61 : index
    %61 = memref.load %arg1[%c61] : memref<104xf32, #tpu.memory_space<smem>>
    %c62 = arith.constant 62 : index
    %62 = memref.load %arg1[%c62] : memref<104xf32, #tpu.memory_space<smem>>
    %c63 = arith.constant 63 : index
    %63 = memref.load %arg1[%c63] : memref<104xf32, #tpu.memory_space<smem>>
    %c64 = arith.constant 64 : index
    %64 = memref.load %arg1[%c64] : memref<104xf32, #tpu.memory_space<smem>>
    %c65 = arith.constant 65 : index
    %65 = memref.load %arg1[%c65] : memref<104xf32, #tpu.memory_space<smem>>
    %c66 = arith.constant 66 : index
    %66 = memref.load %arg1[%c66] : memref<104xf32, #tpu.memory_space<smem>>
    %c67 = arith.constant 67 : index
    %67 = memref.load %arg1[%c67] : memref<104xf32, #tpu.memory_space<smem>>
    %c68 = arith.constant 68 : index
    %68 = memref.load %arg1[%c68] : memref<104xf32, #tpu.memory_space<smem>>
    %c69 = arith.constant 69 : index
    %69 = memref.load %arg1[%c69] : memref<104xf32, #tpu.memory_space<smem>>
    %c70 = arith.constant 70 : index
    %70 = memref.load %arg1[%c70] : memref<104xf32, #tpu.memory_space<smem>>
    %c71 = arith.constant 71 : index
    %71 = memref.load %arg1[%c71] : memref<104xf32, #tpu.memory_space<smem>>
    %c72 = arith.constant 72 : index
    %72 = memref.load %arg1[%c72] : memref<104xf32, #tpu.memory_space<smem>>
    %c73 = arith.constant 73 : index
    %73 = memref.load %arg1[%c73] : memref<104xf32, #tpu.memory_space<smem>>
    %c74 = arith.constant 74 : index
    %74 = memref.load %arg1[%c74] : memref<104xf32, #tpu.memory_space<smem>>
    %c75 = arith.constant 75 : index
    %75 = memref.load %arg1[%c75] : memref<104xf32, #tpu.memory_space<smem>>
    %c76 = arith.constant 76 : index
    %76 = memref.load %arg1[%c76] : memref<104xf32, #tpu.memory_space<smem>>
    %c77 = arith.constant 77 : index
    %77 = memref.load %arg1[%c77] : memref<104xf32, #tpu.memory_space<smem>>
    %c78 = arith.constant 78 : index
    %78 = memref.load %arg1[%c78] : memref<104xf32, #tpu.memory_space<smem>>
    %c79 = arith.constant 79 : index
    %79 = memref.load %arg1[%c79] : memref<104xf32, #tpu.memory_space<smem>>
    %c80 = arith.constant 80 : index
    %80 = memref.load %arg1[%c80] : memref<104xf32, #tpu.memory_space<smem>>
    %c81 = arith.constant 81 : index
    %81 = memref.load %arg1[%c81] : memref<104xf32, #tpu.memory_space<smem>>
    %c82 = arith.constant 82 : index
    %82 = memref.load %arg1[%c82] : memref<104xf32, #tpu.memory_space<smem>>
    %c92 = arith.constant 92 : index
    %83 = memref.load %arg1[%c92] : memref<104xf32, #tpu.memory_space<smem>>
    %c83 = arith.constant 83 : index
    %84 = memref.load %arg1[%c83] : memref<104xf32, #tpu.memory_space<smem>>
    %c93 = arith.constant 93 : index
    %85 = memref.load %arg1[%c93] : memref<104xf32, #tpu.memory_space<smem>>
    %c84 = arith.constant 84 : index
    %86 = memref.load %arg1[%c84] : memref<104xf32, #tpu.memory_space<smem>>
    %c94 = arith.constant 94 : index
    %87 = memref.load %arg1[%c94] : memref<104xf32, #tpu.memory_space<smem>>
    %c85 = arith.constant 85 : index
    %88 = memref.load %arg1[%c85] : memref<104xf32, #tpu.memory_space<smem>>
    %c95 = arith.constant 95 : index
    %89 = memref.load %arg1[%c95] : memref<104xf32, #tpu.memory_space<smem>>
    %c86 = arith.constant 86 : index
    %90 = memref.load %arg1[%c86] : memref<104xf32, #tpu.memory_space<smem>>
    %c96 = arith.constant 96 : index
    %91 = memref.load %arg1[%c96] : memref<104xf32, #tpu.memory_space<smem>>
    %c87 = arith.constant 87 : index
    %92 = memref.load %arg1[%c87] : memref<104xf32, #tpu.memory_space<smem>>
    %c97 = arith.constant 97 : index
    %93 = memref.load %arg1[%c97] : memref<104xf32, #tpu.memory_space<smem>>
    %c88 = arith.constant 88 : index
    %94 = memref.load %arg1[%c88] : memref<104xf32, #tpu.memory_space<smem>>
    %c98 = arith.constant 98 : index
    %95 = memref.load %arg1[%c98] : memref<104xf32, #tpu.memory_space<smem>>
    %c89 = arith.constant 89 : index
    %96 = memref.load %arg1[%c89] : memref<104xf32, #tpu.memory_space<smem>>
    %c99 = arith.constant 99 : index
    %97 = memref.load %arg1[%c99] : memref<104xf32, #tpu.memory_space<smem>>
    %c90 = arith.constant 90 : index
    %98 = memref.load %arg1[%c90] : memref<104xf32, #tpu.memory_space<smem>>
    %c100 = arith.constant 100 : index
    %99 = memref.load %arg1[%c100] : memref<104xf32, #tpu.memory_space<smem>>
    %c91 = arith.constant 91 : index
    %100 = memref.load %arg1[%c91] : memref<104xf32, #tpu.memory_space<smem>>
    %c101 = arith.constant 101 : index
    %101 = memref.load %arg1[%c101] : memref<104xf32, #tpu.memory_space<smem>>
    %c102 = arith.constant 102 : index
    %102 = memref.load %arg1[%c102] : memref<104xf32, #tpu.memory_space<smem>>
    %c103 = arith.constant 103 : index
    %103 = memref.load %arg1[%c103] : memref<104xf32, #tpu.memory_space<smem>>
    %104 = tpu.iota {dimensions = array<i32: 1>} : vector<8x128xi32>
    %c1_i32 = arith.constant 1 : i32
    %105 = vector.broadcast %c1_i32 : i32 to vector<8x128xi32>
    %106 = arith.andi %104, %105 : vector<8x128xi32>
    %c0_i32 = arith.constant 0 : i32
    %107 = vector.broadcast %c0_i32 : i32 to vector<8x128xi32>
    %108 = arith.cmpi eq, %106, %107 : vector<8x128xi32>
    %c0_i32_0 = arith.constant 0 : i32
    %c8_i32 = arith.constant 8 : i32
    %109 = arith.muli %c0_i32_0, %c8_i32 : i32
    %110 = tpu.assume_multiple %109, 8 : i32
    %111 = arith.index_cast %110 : i32 to index
    %c0_1 = arith.constant 0 : index
    %112 = vector.load %arg2[%111, %c0_1] : memref<8x128xf32, #tpu.memory_space<vmem>>, vector<8x128xf32>
    %c127_i32 = arith.constant 127 : i32
    %113 = tpu.dynamic_rotate %112 by %c127_i32 dim 1 : vector<8x128xf32>, i32 -> vector<8x128xf32>
    %114 = vector.broadcast %0 : f32 to vector<8x128xf32>
    %115 = arith.mulf %114, %112 : vector<8x128xf32>
    %116 = vector.broadcast %1 : f32 to vector<8x128xf32>
    %117 = arith.mulf %116, %113 : vector<8x128xf32>
    %118 = arith.addf %115, %117 : vector<8x128xf32>
    %119 = vector.broadcast %20 : f32 to vector<8x128xf32>
    %120 = arith.addf %118, %119 : vector<8x128xf32>
    %cst = arith.constant 0.000000e+00 : f32
    %121 = vector.broadcast %cst : f32 to vector<8x128xf32>
    %122 = arith.maximumf %120, %121 : vector<8x128xf32>
    %123 = vector.broadcast %30 : f32 to vector<8x128xf32>
    %124 = arith.mulf %123, %122 : vector<8x128xf32>
    %125 = vector.broadcast %31 : f32 to vector<8x128xf32>
    %126 = arith.mulf %125, %122 : vector<8x128xf32>
    %127 = vector.broadcast %2 : f32 to vector<8x128xf32>
    %128 = arith.mulf %127, %112 : vector<8x128xf32>
    %129 = vector.broadcast %3 : f32 to vector<8x128xf32>
    %130 = arith.mulf %129, %113 : vector<8x128xf32>
    %131 = arith.addf %128, %130 : vector<8x128xf32>
    %132 = vector.broadcast %21 : f32 to vector<8x128xf32>
    %133 = arith.addf %131, %132 : vector<8x128xf32>
    %cst_2 = arith.constant 0.000000e+00 : f32
    %134 = vector.broadcast %cst_2 : f32 to vector<8x128xf32>
    %135 = arith.maximumf %133, %134 : vector<8x128xf32>
    %136 = vector.broadcast %32 : f32 to vector<8x128xf32>
    %137 = arith.mulf %136, %135 : vector<8x128xf32>
    %138 = arith.addf %124, %137 : vector<8x128xf32>
    %139 = vector.broadcast %33 : f32 to vector<8x128xf32>
    %140 = arith.mulf %139, %135 : vector<8x128xf32>
    %141 = arith.addf %126, %140 : vector<8x128xf32>
    %142 = vector.broadcast %4 : f32 to vector<8x128xf32>
    %143 = arith.mulf %142, %112 : vector<8x128xf32>
    %144 = vector.broadcast %5 : f32 to vector<8x128xf32>
    %145 = arith.mulf %144, %113 : vector<8x128xf32>
    %146 = arith.addf %143, %145 : vector<8x128xf32>
    %147 = vector.broadcast %22 : f32 to vector<8x128xf32>
    %148 = arith.addf %146, %147 : vector<8x128xf32>
    %cst_3 = arith.constant 0.000000e+00 : f32
    %149 = vector.broadcast %cst_3 : f32 to vector<8x128xf32>
    %150 = arith.maximumf %148, %149 : vector<8x128xf32>
    %151 = vector.broadcast %34 : f32 to vector<8x128xf32>
    %152 = arith.mulf %151, %150 : vector<8x128xf32>
    %153 = arith.addf %138, %152 : vector<8x128xf32>
    %154 = vector.broadcast %35 : f32 to vector<8x128xf32>
    %155 = arith.mulf %154, %150 : vector<8x128xf32>
    %156 = arith.addf %141, %155 : vector<8x128xf32>
    %157 = vector.broadcast %6 : f32 to vector<8x128xf32>
    %158 = arith.mulf %157, %112 : vector<8x128xf32>
    %159 = vector.broadcast %7 : f32 to vector<8x128xf32>
    %160 = arith.mulf %159, %113 : vector<8x128xf32>
    %161 = arith.addf %158, %160 : vector<8x128xf32>
    %162 = vector.broadcast %23 : f32 to vector<8x128xf32>
    %163 = arith.addf %161, %162 : vector<8x128xf32>
    %cst_4 = arith.constant 0.000000e+00 : f32
    %164 = vector.broadcast %cst_4 : f32 to vector<8x128xf32>
    %165 = arith.maximumf %163, %164 : vector<8x128xf32>
    %166 = vector.broadcast %36 : f32 to vector<8x128xf32>
    %167 = arith.mulf %166, %165 : vector<8x128xf32>
    %168 = arith.addf %153, %167 : vector<8x128xf32>
    %169 = vector.broadcast %37 : f32 to vector<8x128xf32>
    %170 = arith.mulf %169, %165 : vector<8x128xf32>
    %171 = arith.addf %156, %170 : vector<8x128xf32>
    %172 = vector.broadcast %8 : f32 to vector<8x128xf32>
    %173 = arith.mulf %172, %112 : vector<8x128xf32>
    %174 = vector.broadcast %9 : f32 to vector<8x128xf32>
    %175 = arith.mulf %174, %113 : vector<8x128xf32>
    %176 = arith.addf %173, %175 : vector<8x128xf32>
    %177 = vector.broadcast %24 : f32 to vector<8x128xf32>
    %178 = arith.addf %176, %177 : vector<8x128xf32>
    %cst_5 = arith.constant 0.000000e+00 : f32
    %179 = vector.broadcast %cst_5 : f32 to vector<8x128xf32>
    %180 = arith.maximumf %178, %179 : vector<8x128xf32>
    %181 = vector.broadcast %38 : f32 to vector<8x128xf32>
    %182 = arith.mulf %181, %180 : vector<8x128xf32>
    %183 = arith.addf %168, %182 : vector<8x128xf32>
    %184 = vector.broadcast %39 : f32 to vector<8x128xf32>
    %185 = arith.mulf %184, %180 : vector<8x128xf32>
    %186 = arith.addf %171, %185 : vector<8x128xf32>
    %187 = vector.broadcast %10 : f32 to vector<8x128xf32>
    %188 = arith.mulf %187, %112 : vector<8x128xf32>
    %189 = vector.broadcast %11 : f32 to vector<8x128xf32>
    %190 = arith.mulf %189, %113 : vector<8x128xf32>
    %191 = arith.addf %188, %190 : vector<8x128xf32>
    %192 = vector.broadcast %25 : f32 to vector<8x128xf32>
    %193 = arith.addf %191, %192 : vector<8x128xf32>
    %cst_6 = arith.constant 0.000000e+00 : f32
    %194 = vector.broadcast %cst_6 : f32 to vector<8x128xf32>
    %195 = arith.maximumf %193, %194 : vector<8x128xf32>
    %196 = vector.broadcast %40 : f32 to vector<8x128xf32>
    %197 = arith.mulf %196, %195 : vector<8x128xf32>
    %198 = arith.addf %183, %197 : vector<8x128xf32>
    %199 = vector.broadcast %41 : f32 to vector<8x128xf32>
    %200 = arith.mulf %199, %195 : vector<8x128xf32>
    %201 = arith.addf %186, %200 : vector<8x128xf32>
    %202 = vector.broadcast %12 : f32 to vector<8x128xf32>
    %203 = arith.mulf %202, %112 : vector<8x128xf32>
    %204 = vector.broadcast %13 : f32 to vector<8x128xf32>
    %205 = arith.mulf %204, %113 : vector<8x128xf32>
    %206 = arith.addf %203, %205 : vector<8x128xf32>
    %207 = vector.broadcast %26 : f32 to vector<8x128xf32>
    %208 = arith.addf %206, %207 : vector<8x128xf32>
    %cst_7 = arith.constant 0.000000e+00 : f32
    %209 = vector.broadcast %cst_7 : f32 to vector<8x128xf32>
    %210 = arith.maximumf %208, %209 : vector<8x128xf32>
    %211 = vector.broadcast %42 : f32 to vector<8x128xf32>
    %212 = arith.mulf %211, %210 : vector<8x128xf32>
    %213 = arith.addf %198, %212 : vector<8x128xf32>
    %214 = vector.broadcast %43 : f32 to vector<8x128xf32>
    %215 = arith.mulf %214, %210 : vector<8x128xf32>
    %216 = arith.addf %201, %215 : vector<8x128xf32>
    %217 = vector.broadcast %14 : f32 to vector<8x128xf32>
    %218 = arith.mulf %217, %112 : vector<8x128xf32>
    %219 = vector.broadcast %15 : f32 to vector<8x128xf32>
    %220 = arith.mulf %219, %113 : vector<8x128xf32>
    %221 = arith.addf %218, %220 : vector<8x128xf32>
    %222 = vector.broadcast %27 : f32 to vector<8x128xf32>
    %223 = arith.addf %221, %222 : vector<8x128xf32>
    %cst_8 = arith.constant 0.000000e+00 : f32
    %224 = vector.broadcast %cst_8 : f32 to vector<8x128xf32>
    %225 = arith.maximumf %223, %224 : vector<8x128xf32>
    %226 = vector.broadcast %44 : f32 to vector<8x128xf32>
    %227 = arith.mulf %226, %225 : vector<8x128xf32>
    %228 = arith.addf %213, %227 : vector<8x128xf32>
    %229 = vector.broadcast %45 : f32 to vector<8x128xf32>
    %230 = arith.mulf %229, %225 : vector<8x128xf32>
    %231 = arith.addf %216, %230 : vector<8x128xf32>
    %232 = vector.broadcast %16 : f32 to vector<8x128xf32>
    %233 = arith.mulf %232, %112 : vector<8x128xf32>
    %234 = vector.broadcast %17 : f32 to vector<8x128xf32>
    %235 = arith.mulf %234, %113 : vector<8x128xf32>
    %236 = arith.addf %233, %235 : vector<8x128xf32>
    %237 = vector.broadcast %28 : f32 to vector<8x128xf32>
    %238 = arith.addf %236, %237 : vector<8x128xf32>
    %cst_9 = arith.constant 0.000000e+00 : f32
    %239 = vector.broadcast %cst_9 : f32 to vector<8x128xf32>
    %240 = arith.maximumf %238, %239 : vector<8x128xf32>
    %241 = vector.broadcast %46 : f32 to vector<8x128xf32>
    %242 = arith.mulf %241, %240 : vector<8x128xf32>
    %243 = arith.addf %228, %242 : vector<8x128xf32>
    %244 = vector.broadcast %47 : f32 to vector<8x128xf32>
    %245 = arith.mulf %244, %240 : vector<8x128xf32>
    %246 = arith.addf %231, %245 : vector<8x128xf32>
    %247 = vector.broadcast %18 : f32 to vector<8x128xf32>
    %248 = arith.mulf %247, %112 : vector<8x128xf32>
    %249 = vector.broadcast %19 : f32 to vector<8x128xf32>
    %250 = arith.mulf %249, %113 : vector<8x128xf32>
    %251 = arith.addf %248, %250 : vector<8x128xf32>
    %252 = vector.broadcast %29 : f32 to vector<8x128xf32>
    %253 = arith.addf %251, %252 : vector<8x128xf32>
    %cst_10 = arith.constant 0.000000e+00 : f32
    %254 = vector.broadcast %cst_10 : f32 to vector<8x128xf32>
    %255 = arith.maximumf %253, %254 : vector<8x128xf32>
    %256 = vector.broadcast %48 : f32 to vector<8x128xf32>
    %257 = arith.mulf %256, %255 : vector<8x128xf32>
    %258 = arith.addf %243, %257 : vector<8x128xf32>
    %259 = vector.broadcast %49 : f32 to vector<8x128xf32>
    %260 = arith.mulf %259, %255 : vector<8x128xf32>
    %261 = arith.addf %246, %260 : vector<8x128xf32>
    %262 = vector.broadcast %50 : f32 to vector<8x128xf32>
    %263 = arith.addf %258, %262 : vector<8x128xf32>
    %264 = vector.broadcast %51 : f32 to vector<8x128xf32>
    %265 = arith.addf %261, %264 : vector<8x128xf32>
    %266 = vector.broadcast %52 : f32 to vector<8x128xf32>
    %267 = arith.mulf %266, %263 : vector<8x128xf32>
    %268 = vector.broadcast %53 : f32 to vector<8x128xf32>
    %269 = arith.mulf %268, %265 : vector<8x128xf32>
    %270 = arith.addf %267, %269 : vector<8x128xf32>
    %271 = vector.broadcast %72 : f32 to vector<8x128xf32>
    %272 = arith.addf %270, %271 : vector<8x128xf32>
    %cst_11 = arith.constant 0.000000e+00 : f32
    %273 = vector.broadcast %cst_11 : f32 to vector<8x128xf32>
    %274 = arith.maximumf %272, %273 : vector<8x128xf32>
    %275 = vector.broadcast %82 : f32 to vector<8x128xf32>
    %276 = arith.mulf %275, %274 : vector<8x128xf32>
    %277 = vector.broadcast %83 : f32 to vector<8x128xf32>
    %278 = arith.mulf %277, %274 : vector<8x128xf32>
    %279 = vector.broadcast %54 : f32 to vector<8x128xf32>
    %280 = arith.mulf %279, %263 : vector<8x128xf32>
    %281 = vector.broadcast %55 : f32 to vector<8x128xf32>
    %282 = arith.mulf %281, %265 : vector<8x128xf32>
    %283 = arith.addf %280, %282 : vector<8x128xf32>
    %284 = vector.broadcast %73 : f32 to vector<8x128xf32>
    %285 = arith.addf %283, %284 : vector<8x128xf32>
    %cst_12 = arith.constant 0.000000e+00 : f32
    %286 = vector.broadcast %cst_12 : f32 to vector<8x128xf32>
    %287 = arith.maximumf %285, %286 : vector<8x128xf32>
    %288 = vector.broadcast %84 : f32 to vector<8x128xf32>
    %289 = arith.mulf %288, %287 : vector<8x128xf32>
    %290 = arith.addf %276, %289 : vector<8x128xf32>
    %291 = vector.broadcast %85 : f32 to vector<8x128xf32>
    %292 = arith.mulf %291, %287 : vector<8x128xf32>
    %293 = arith.addf %278, %292 : vector<8x128xf32>
    %294 = vector.broadcast %56 : f32 to vector<8x128xf32>
    %295 = arith.mulf %294, %263 : vector<8x128xf32>
    %296 = vector.broadcast %57 : f32 to vector<8x128xf32>
    %297 = arith.mulf %296, %265 : vector<8x128xf32>
    %298 = arith.addf %295, %297 : vector<8x128xf32>
    %299 = vector.broadcast %74 : f32 to vector<8x128xf32>
    %300 = arith.addf %298, %299 : vector<8x128xf32>
    %cst_13 = arith.constant 0.000000e+00 : f32
    %301 = vector.broadcast %cst_13 : f32 to vector<8x128xf32>
    %302 = arith.maximumf %300, %301 : vector<8x128xf32>
    %303 = vector.broadcast %86 : f32 to vector<8x128xf32>
    %304 = arith.mulf %303, %302 : vector<8x128xf32>
    %305 = arith.addf %290, %304 : vector<8x128xf32>
    %306 = vector.broadcast %87 : f32 to vector<8x128xf32>
    %307 = arith.mulf %306, %302 : vector<8x128xf32>
    %308 = arith.addf %293, %307 : vector<8x128xf32>
    %309 = vector.broadcast %58 : f32 to vector<8x128xf32>
    %310 = arith.mulf %309, %263 : vector<8x128xf32>
    %311 = vector.broadcast %59 : f32 to vector<8x128xf32>
    %312 = arith.mulf %311, %265 : vector<8x128xf32>
    %313 = arith.addf %310, %312 : vector<8x128xf32>
    %314 = vector.broadcast %75 : f32 to vector<8x128xf32>
    %315 = arith.addf %313, %314 : vector<8x128xf32>
    %cst_14 = arith.constant 0.000000e+00 : f32
    %316 = vector.broadcast %cst_14 : f32 to vector<8x128xf32>
    %317 = arith.maximumf %315, %316 : vector<8x128xf32>
    %318 = vector.broadcast %88 : f32 to vector<8x128xf32>
    %319 = arith.mulf %318, %317 : vector<8x128xf32>
    %320 = arith.addf %305, %319 : vector<8x128xf32>
    %321 = vector.broadcast %89 : f32 to vector<8x128xf32>
    %322 = arith.mulf %321, %317 : vector<8x128xf32>
    %323 = arith.addf %308, %322 : vector<8x128xf32>
    %324 = vector.broadcast %60 : f32 to vector<8x128xf32>
    %325 = arith.mulf %324, %263 : vector<8x128xf32>
    %326 = vector.broadcast %61 : f32 to vector<8x128xf32>
    %327 = arith.mulf %326, %265 : vector<8x128xf32>
    %328 = arith.addf %325, %327 : vector<8x128xf32>
    %329 = vector.broadcast %76 : f32 to vector<8x128xf32>
    %330 = arith.addf %328, %329 : vector<8x128xf32>
    %cst_15 = arith.constant 0.000000e+00 : f32
    %331 = vector.broadcast %cst_15 : f32 to vector<8x128xf32>
    %332 = arith.maximumf %330, %331 : vector<8x128xf32>
    %333 = vector.broadcast %90 : f32 to vector<8x128xf32>
    %334 = arith.mulf %333, %332 : vector<8x128xf32>
    %335 = arith.addf %320, %334 : vector<8x128xf32>
    %336 = vector.broadcast %91 : f32 to vector<8x128xf32>
    %337 = arith.mulf %336, %332 : vector<8x128xf32>
    %338 = arith.addf %323, %337 : vector<8x128xf32>
    %339 = vector.broadcast %62 : f32 to vector<8x128xf32>
    %340 = arith.mulf %339, %263 : vector<8x128xf32>
    %341 = vector.broadcast %63 : f32 to vector<8x128xf32>
    %342 = arith.mulf %341, %265 : vector<8x128xf32>
    %343 = arith.addf %340, %342 : vector<8x128xf32>
    %344 = vector.broadcast %77 : f32 to vector<8x128xf32>
    %345 = arith.addf %343, %344 : vector<8x128xf32>
    %cst_16 = arith.constant 0.000000e+00 : f32
    %346 = vector.broadcast %cst_16 : f32 to vector<8x128xf32>
    %347 = arith.maximumf %345, %346 : vector<8x128xf32>
    %348 = vector.broadcast %92 : f32 to vector<8x128xf32>
    %349 = arith.mulf %348, %347 : vector<8x128xf32>
    %350 = arith.addf %335, %349 : vector<8x128xf32>
    %351 = vector.broadcast %93 : f32 to vector<8x128xf32>
    %352 = arith.mulf %351, %347 : vector<8x128xf32>
    %353 = arith.addf %338, %352 : vector<8x128xf32>
    %354 = vector.broadcast %64 : f32 to vector<8x128xf32>
    %355 = arith.mulf %354, %263 : vector<8x128xf32>
    %356 = vector.broadcast %65 : f32 to vector<8x128xf32>
    %357 = arith.mulf %356, %265 : vector<8x128xf32>
    %358 = arith.addf %355, %357 : vector<8x128xf32>
    %359 = vector.broadcast %78 : f32 to vector<8x128xf32>
    %360 = arith.addf %358, %359 : vector<8x128xf32>
    %cst_17 = arith.constant 0.000000e+00 : f32
    %361 = vector.broadcast %cst_17 : f32 to vector<8x128xf32>
    %362 = arith.maximumf %360, %361 : vector<8x128xf32>
    %363 = vector.broadcast %94 : f32 to vector<8x128xf32>
    %364 = arith.mulf %363, %362 : vector<8x128xf32>
    %365 = arith.addf %350, %364 : vector<8x128xf32>
    %366 = vector.broadcast %95 : f32 to vector<8x128xf32>
    %367 = arith.mulf %366, %362 : vector<8x128xf32>
    %368 = arith.addf %353, %367 : vector<8x128xf32>
    %369 = vector.broadcast %66 : f32 to vector<8x128xf32>
    %370 = arith.mulf %369, %263 : vector<8x128xf32>
    %371 = vector.broadcast %67 : f32 to vector<8x128xf32>
    %372 = arith.mulf %371, %265 : vector<8x128xf32>
    %373 = arith.addf %370, %372 : vector<8x128xf32>
    %374 = vector.broadcast %79 : f32 to vector<8x128xf32>
    %375 = arith.addf %373, %374 : vector<8x128xf32>
    %cst_18 = arith.constant 0.000000e+00 : f32
    %376 = vector.broadcast %cst_18 : f32 to vector<8x128xf32>
    %377 = arith.maximumf %375, %376 : vector<8x128xf32>
    %378 = vector.broadcast %96 : f32 to vector<8x128xf32>
    %379 = arith.mulf %378, %377 : vector<8x128xf32>
    %380 = arith.addf %365, %379 : vector<8x128xf32>
    %381 = vector.broadcast %97 : f32 to vector<8x128xf32>
    %382 = arith.mulf %381, %377 : vector<8x128xf32>
    %383 = arith.addf %368, %382 : vector<8x128xf32>
    %384 = vector.broadcast %68 : f32 to vector<8x128xf32>
    %385 = arith.mulf %384, %263 : vector<8x128xf32>
    %386 = vector.broadcast %69 : f32 to vector<8x128xf32>
    %387 = arith.mulf %386, %265 : vector<8x128xf32>
    %388 = arith.addf %385, %387 : vector<8x128xf32>
    %389 = vector.broadcast %80 : f32 to vector<8x128xf32>
    %390 = arith.addf %388, %389 : vector<8x128xf32>
    %cst_19 = arith.constant 0.000000e+00 : f32
    %391 = vector.broadcast %cst_19 : f32 to vector<8x128xf32>
    %392 = arith.maximumf %390, %391 : vector<8x128xf32>
    %393 = vector.broadcast %98 : f32 to vector<8x128xf32>
    %394 = arith.mulf %393, %392 : vector<8x128xf32>
    %395 = arith.addf %380, %394 : vector<8x128xf32>
    %396 = vector.broadcast %99 : f32 to vector<8x128xf32>
    %397 = arith.mulf %396, %392 : vector<8x128xf32>
    %398 = arith.addf %383, %397 : vector<8x128xf32>
    %399 = vector.broadcast %70 : f32 to vector<8x128xf32>
    %400 = arith.mulf %399, %263 : vector<8x128xf32>
    %401 = vector.broadcast %71 : f32 to vector<8x128xf32>
    %402 = arith.mulf %401, %265 : vector<8x128xf32>
    %403 = arith.addf %400, %402 : vector<8x128xf32>
    %404 = vector.broadcast %81 : f32 to vector<8x128xf32>
    %405 = arith.addf %403, %404 : vector<8x128xf32>
    %cst_20 = arith.constant 0.000000e+00 : f32
    %406 = vector.broadcast %cst_20 : f32 to vector<8x128xf32>
    %407 = arith.maximumf %405, %406 : vector<8x128xf32>
    %408 = vector.broadcast %100 : f32 to vector<8x128xf32>
    %409 = arith.mulf %408, %407 : vector<8x128xf32>
    %410 = arith.addf %395, %409 : vector<8x128xf32>
    %411 = vector.broadcast %101 : f32 to vector<8x128xf32>
    %412 = arith.mulf %411, %407 : vector<8x128xf32>
    %413 = arith.addf %398, %412 : vector<8x128xf32>
    %414 = vector.broadcast %102 : f32 to vector<8x128xf32>
    %415 = arith.addf %410, %414 : vector<8x128xf32>
    %416 = vector.broadcast %103 : f32 to vector<8x128xf32>
    %417 = arith.addf %413, %416 : vector<8x128xf32>
    %418 = arith.mulf %415, %415 : vector<8x128xf32>
    %419 = arith.mulf %417, %417 : vector<8x128xf32>
    %420 = arith.addf %418, %419 : vector<8x128xf32>
    %cst_21 = arith.constant 1.000000e-24 : f32
    %421 = vector.broadcast %cst_21 : f32 to vector<8x128xf32>
    %422 = arith.maximumf %420, %421 : vector<8x128xf32>
    %423 = math.rsqrt %422 : vector<8x128xf32>
    %424 = arith.mulf %415, %423 : vector<8x128xf32>
    %425 = arith.mulf %417, %423 : vector<8x128xf32>
    %c1_i32_22 = arith.constant 1 : i32
    %426 = tpu.dynamic_rotate %425 by %c1_i32_22 dim 1 : vector<8x128xf32>, i32 -> vector<8x128xf32>
    %427 = arith.select %108, %424, %426 : vector<8x128xi1>, vector<8x128xf32>
    %428 = arith.index_cast %110 : i32 to index
    %c0_23 = arith.constant 0 : index
    %429 = vector.load %arg3[%428, %c0_23] : memref<8x128xf32, #tpu.memory_space<vmem>>, vector<8x128xf32>
    tpu.vector_store %arg3[%428, %c0_23], %427 {strides = array<i32>} : memref<8x128xf32, #tpu.memory_space<vmem>>, vector<8x128xf32>,
    %c1_i32_24 = arith.constant 1 : i32
    return
  }
  func.func @transform_0(%arg0: i32) -> i32 {
    %c0_i32 = arith.constant 0 : i32
    %c0_i32_0 = arith.constant 0 : i32
    return %c0_i32 : i32
  }
  func.func @transform_1(%arg0: i32) -> (i32, i32) {
    %c0_i32 = arith.constant 0 : i32
    %c0_i32_0 = arith.constant 0 : i32
    return %arg0, %c0_i32 : i32, i32
  }
  func.func @transform_2(%arg0: i32) -> (i32, i32) {
    %c0_i32 = arith.constant 0 : i32
    %c0_i32_0 = arith.constant 0 : i32
    return %arg0, %c0_i32 : i32, i32
  }
}

</mosaic_0001>

<llo_original>
// kernel: tpu_custom_call.1
$region0: #{tpu_custom_call.1}
  #allocation0 [shape = 'u32[]', space=smem, size = 0x4, offset = 0x4, fixed_abs, tag = 'smem constant byte address 0x4 - core index']
  #allocation1 [shape = 'u32[72,128]{1,0:T(1,128)}', space=vmem, size = 0x9000, scoped, tag = 'internal scratch']
  %s0 = inlined_call_operand.hbm [shape: f32[104], index: 0, kind: input, shape index: {}]
  %s1 = inlined_call_operand.hbm [shape: f32[8,128], index: 1, kind: input, shape index: {}]
  %s2 = inlined_call_operand.hbm [shape: f32[8,128], index: 2, kind: output, shape index: {}]
  %s3 = sld [smem:[#allocation0]]
  $region26: #{tpu_custom_call.1} parent=0
    _
  %s5 = ssub.s32 1, %s3
  %s6 = scalar_select 0, %s5, %s3
  $region1: #{tpu_custom_call.1} parent=0
    #allocation2 [shape = 'u8[512]{0}', space=smem, size = 0x200, scoped, tag = 'input window, operand 0, single buffered']
    #allocation3 [shape = 's32[1]{0}', space=sflag, size = 0x4, scoped, tag = 'scoped memory for tpu_custom_call.1']
    #allocation4 [shape = 's32[1]{0}', space=sflag, size = 0x4, scoped, tag = 'scoped memory for tpu_custom_call.1']
    #allocation5 [shape = 's32[1]{0}', space=sflag, size = 0x4, scoped, tag = 'scoped memory for tpu_custom_call.1']
    #allocation6 [shape = 'u8[4096]{0}', space=vmem, size = 0x1000, scoped, tag = 'input window, operand 1, single buffered']
    #allocation7 [shape = 'u8[4096]{0}', space=vmem, size = 0x1000, scoped, tag = 'output window, operand 0, single buffered']
    %7 = vsyncpa [#allocation5], 0
    %8 = vsyncpa [#allocation3], 0
    %9 = vsyncpa [#allocation4], 0
    // Predicated region
    $region2: #{tpu_custom_call.1} parent=1 // pred_check
      _
    $region3: #{tpu_custom_call.1} parent=1 // pred_check_branch
      %11 = sbr.rel (0) target = $region5
    $region4: #{tpu_custom_call.1} parent=1 // pred_region
      %13 = vsyncadd [#allocation5], 0
      %s15 = sshll.u32 %s0, 4
      %s16 = int_to_ptr.hbm [resolvable:$true] %s15
      %18 = dma.hbm_to_smem %s16, 16, [#allocation2], [#allocation5]
    $region5: #{tpu_custom_call.1} parent=1 // pred_fallthru
      _
    // Predicated region
    $region6: #{tpu_custom_call.1} parent=1 // pred_check
      _
    $region7: #{tpu_custom_call.1} parent=1 // pred_check_branch
      %20 = sbr.rel (0) target = $region9
    $region8: #{tpu_custom_call.1} parent=1 // pred_region
      %22 = vsyncadd [#allocation3], 0
      %s24 = sshll.u32 %s1, 4
      %s25 = int_to_ptr.hbm [resolvable:$true] %s24
      %s26 = sshll.u32 [#allocation6], 4
      %s27 = int_to_ptr.vmem [resolvable:$true] %s26
      %29 = dma.hbm_to_vmem [thread:$0]  %s25, 128, %s27, [#allocation3]
    $region9: #{tpu_custom_call.1} parent=1 // pred_fallthru
      _
    // Predicated region
    $region10: #{tpu_custom_call.1} parent=1 // pred_check
      _
    $region11: #{tpu_custom_call.1} parent=1 // pred_check_branch
      %31 = sbr.rel (0) target = $region13
    $region12: #{tpu_custom_call.1} parent=1 // pred_region
      %33 = dma.done [#allocation5], 16
    $region13: #{tpu_custom_call.1} parent=1 // pred_fallthru
      _
    // Predicated region
    $region14: #{tpu_custom_call.1} parent=1 // pred_check
      _
    $region15: #{tpu_custom_call.1} parent=1 // pred_check_branch
      %35 = sbr.rel (0) target = $region17
    $region16: #{tpu_custom_call.1} parent=1 // pred_region
      %37 = dma.done [#allocation3], 128
    $region17: #{tpu_custom_call.1} parent=1 // pred_fallthru
      _
    %38 = sfence
    %s39 = sld [smem:[#allocation2]]
    %s40 = sld [smem:[#allocation2 + $0x1]]
    %s41 = sld [smem:[#allocation2 + $0x2]]
    %s42 = sld [smem:[#allocation2 + $0x3]]
    %s43 = sld [smem:[#allocation2 + $0x4]]
    %s44 = sld [smem:[#allocation2 + $0x5]]
    %s45 = sld [smem:[#allocation2 + $0x6]]
    %s46 = sld [smem:[#allocation2 + $0x7]]
    %s47 = sld [smem:[#allocation2 + $0x8]]
    %s48 = sld [smem:[#allocation2 + $0x9]]
    %s49 = sld [smem:[#allocation2 + $0xa]]
    %s50 = sld [smem:[#allocation2 + $0xb]]
    %s51 = sld [smem:[#allocation2 + $0xc]]
    %s52 = sld [smem:[#allocation2 + $0xd]]
    %s53 = sld [smem:[#allocation2 + $0xe]]
    %s54 = sld [smem:[#allocation2 + $0xf]]
    %s55 = sld [smem:[#allocation2 + $0x10]]
    %s56 = sld [smem:[#allocation2 + $0x11]]
    %s57 = sld [smem:[#allocation2 + $0x12]]
    %s58 = sld [smem:[#allocation2 + $0x13]]
    %s59 = sld [smem:[#allocation2 + $0x14]]
    %s60 = sld [smem:[#allocation2 + $0x15]]
    %s61 = sld [smem:[#allocation2 + $0x16]]
    %s62 = sld [smem:[#allocation2 + $0x17]]
    %s63 = sld [smem:[#allocation2 + $0x18]]
    %s64 = sld [smem:[#allocation2 + $0x19]]
    %s65 = sld [smem:[#allocation2 + $0x1a]]
    %s66 = sld [smem:[#allocation2 + $0x1b]]
    %s67 = sld [smem:[#allocation2 + $0x1c]]
    %s68 = sld [smem:[#allocation2 + $0x1d]]
    %s69 = sld [smem:[#allocation2 + $0x1e]]
    %s70 = sld [smem:[#allocation2 + $0x28]]
    %s71 = sld [smem:[#allocation2 + $0x1f]]
    %s72 = sld [smem:[#allocation2 + $0x29]]
    %s73 = sld [smem:[#allocation2 + $0x20]]
    %s74 = sld [smem:[#allocation2 + $0x2a]]
    %s75 = sld [smem:[#allocation2 + $0x21]]
    %s76 = sld [smem:[#allocation2 + $0x2b]]
    %s77 = sld [smem:[#allocation2 + $0x22]]
    %s78 = sld [smem:[#allocation2 + $0x2c]]
    %s79 = sld [smem:[#allocation2 + $0x23]]
    %s80 = sld [smem:[#allocation2 + $0x2d]]
    %s81 = sld [smem:[#allocation2 + $0x24]]
    %s82 = sld [smem:[#allocation2 + $0x2e]]
    %s83 = sld [smem:[#allocation2 + $0x25]]
    %s84 = sld [smem:[#allocation2 + $0x2f]]
    %s85 = sld [smem:[#allocation2 + $0x26]]
    %s86 = sld [smem:[#allocation2 + $0x30]]
    %s87 = sld [smem:[#allocation2 + $0x27]]
    %s88 = sld [smem:[#allocation2 + $0x31]]
    %s89 = sld [smem:[#allocation2 + $0x32]]
    %s90 = sld [smem:[#allocation2 + $0x33]]
    %s91 = sld [smem:[#allocation2 + $0x34]]
    %s92 = sld [smem:[#allocation2 + $0x35]]
    %s93 = sld [smem:[#allocation2 + $0x36]]
    %s94 = sld [smem:[#allocation2 + $0x37]]
    %s95 = sld [smem:[#allocation2 + $0x38]]
    %s96 = sld [smem:[#allocation2 + $0x39]]
    %s97 = sld [smem:[#allocation2 + $0x3a]]
    %s98 = sld [smem:[#allocation2 + $0x3b]]
    %s99 = sld [smem:[#allocation2 + $0x3c]]
    %s100 = sld [smem:[#allocation2 + $0x3d]]
    %s101 = sld [smem:[#allocation2 + $0x3e]]
    %s102 = sld [smem:[#allocation2 + $0x3f]]
    %s103 = sld [smem:[#allocation2 + $0x40]]
    %s104 = sld [smem:[#allocation2 + $0x41]]
    %s105 = sld [smem:[#allocation2 + $0x42]]
    %s106 = sld [smem:[#allocation2 + $0x43]]
    %s107 = sld [smem:[#allocation2 + $0x44]]
    %s108 = sld [smem:[#allocation2 + $0x45]]
    %s109 = sld [smem:[#allocation2 + $0x46]]
    %s110 = sld [smem:[#allocation2 + $0x47]]
    %s111 = sld [smem:[#allocation2 + $0x48]]
    %s112 = sld [smem:[#allocation2 + $0x49]]
    %s113 = sld [smem:[#allocation2 + $0x4a]]
    %s114 = sld [smem:[#allocation2 + $0x4b]]
    %s115 = sld [smem:[#allocation2 + $0x4c]]
    %s116 = sld [smem:[#allocation2 + $0x4d]]
    %s117 = sld [smem:[#allocation2 + $0x4e]]
    %s118 = sld [smem:[#allocation2 + $0x4f]]
    %s119 = sld [smem:[#allocation2 + $0x50]]
    %s120 = sld [smem:[#allocation2 + $0x51]]
    %s121 = sld [smem:[#allocation2 + $0x52]]
    %s122 = sld [smem:[#allocation2 + $0x5c]]
    %s123 = sld [smem:[#allocation2 + $0x53]]
    %s124 = sld [smem:[#allocation2 + $0x5d]]
    %s125 = sld [smem:[#allocation2 + $0x54]]
    %s126 = sld [smem:[#allocation2 + $0x5e]]
    %s127 = sld [smem:[#allocation2 + $0x55]]
    %s128 = sld [smem:[#allocation2 + $0x5f]]
    %s129 = sld [smem:[#allocation2 + $0x56]]
    %s130 = sld [smem:[#allocation2 + $0x60]]
    %s131 = sld [smem:[#allocation2 + $0x57]]
    %s132 = sld [smem:[#allocation2 + $0x61]]
    %s133 = sld [smem:[#allocation2 + $0x58]]
    %s134 = sld [smem:[#allocation2 + $0x62]]
    %s135 = sld [smem:[#allocation2 + $0x59]]
    %s136 = sld [smem:[#allocation2 + $0x63]]
    %s137 = sld [smem:[#allocation2 + $0x5a]]
    %s138 = sld [smem:[#allocation2 + $0x64]]
    %s139 = sld [smem:[#allocation2 + $0x5b]]
    %s140 = sld [smem:[#allocation2 + $0x65]]
    %s141 = sld [smem:[#allocation2 + $0x66]]
    %s142 = sld [smem:[#allocation2 + $0x67]]
    %v143 = vlaneseq
    %v144 = vand.u32 %v143, 127
    %v145 = vand.u32 %v144, 1
    %vm146 = vcmp.eq.s32.totalorder %v145, 0
    %v147 = vld [vmem:[#allocation6] sm:$0xff]
    %148 = vrot.lane.b32.xlu0 %v147, 127
    %v149 = vpop.permute.xlu0 %148
    %v150 = vstv %s39
    %v151 = vmul.f32 %v150, %v147
    %v152 = vstv %s40
    %v153 = vmul.f32 %v152, %v149
    %v154 = vadd.f32 %v151, %v153
    %v155 = vstv %s59
    %v156 = vadd.f32 %v154, %v155
    %v157 = vmax.f32 %v156, 0.0
    %v158 = vstv %s69
    %v159 = vmul.f32 %v158, %v157
    %v160 = vstv %s70
    %v161 = vmul.f32 %v160, %v157
    %v162 = vstv %s41
    %v163 = vmul.f32 %v162, %v147
    %v164 = vstv %s42
    %v165 = vmul.f32 %v164, %v149
    %v166 = vadd.f32 %v163, %v165
    %v167 = vstv %s60
    %v168 = vadd.f32 %v166, %v167
    %v169 = vmax.f32 %v168, 0.0
    %v170 = vstv %s71
    %v171 = vmul.f32 %v170, %v169
    %v172 = vadd.f32 %v159, %v171
    %v173 = vstv %s72
    %v174 = vmul.f32 %v173, %v169
    %v175 = vadd.f32 %v161, %v174
    %v176 = vstv %s43
    %v177 = vmul.f32 %v176, %v147
    %v178 = vstv %s44
    %v179 = vmul.f32 %v178, %v149
    %v180 = vadd.f32 %v177, %v179
    %v181 = vstv %s61
    %v182 = vadd.f32 %v180, %v181
    %v183 = vmax.f32 %v182, 0.0
    %v184 = vstv %s73
    %v185 = vmul.f32 %v184, %v183
    %v186 = vadd.f32 %v172, %v185
    %v187 = vstv %s74
    %v188 = vmul.f32 %v187, %v183
    %v189 = vadd.f32 %v175, %v188
    %v190 = vstv %s45
    %v191 = vmul.f32 %v190, %v147
    %v192 = vstv %s46
    %v193 = vmul.f32 %v192, %v149
    %v194 = vadd.f32 %v191, %v193
    %v195 = vstv %s62
    %v196 = vadd.f32 %v194, %v195
    %v197 = vmax.f32 %v196, 0.0
    %v198 = vstv %s75
    %v199 = vmul.f32 %v198, %v197
    %v200 = vadd.f32 %v186, %v199
    %v201 = vstv %s76
    %v202 = vmul.f32 %v201, %v197
    %v203 = vadd.f32 %v189, %v202
    %v204 = vstv %s47
    %v205 = vmul.f32 %v204, %v147
    %v206 = vstv %s48
    %v207 = vmul.f32 %v206, %v149
    %v208 = vadd.f32 %v205, %v207
    %v209 = vstv %s63
    %v210 = vadd.f32 %v208, %v209
    %v211 = vmax.f32 %v210, 0.0
    %v212 = vstv %s77
    %v213 = vmul.f32 %v212, %v211
    %v214 = vadd.f32 %v200, %v213
    %v215 = vstv %s78
    %v216 = vmul.f32 %v215, %v211
    %v217 = vadd.f32 %v203, %v216
    %v218 = vstv %s49
    %v219 = vmul.f32 %v218, %v147
    %v220 = vstv %s50
    %v221 = vmul.f32 %v220, %v149
    %v222 = vadd.f32 %v219, %v221
    %v223 = vstv %s64
    %v224 = vadd.f32 %v222, %v223
    %v225 = vmax.f32 %v224, 0.0
    %v226 = vstv %s79
    %v227 = vmul.f32 %v226, %v225
    %v228 = vadd.f32 %v214, %v227
    %v229 = vstv %s80
    %v230 = vmul.f32 %v229, %v225
    %v231 = vadd.f32 %v217, %v230
    %v232 = vstv %s51
    %v233 = vmul.f32 %v232, %v147
    %v234 = vstv %s52
    %v235 = vmul.f32 %v234, %v149
    %v236 = vadd.f32 %v233, %v235
    %v237 = vstv %s65
    %v238 = vadd.f32 %v236, %v237
    %v239 = vmax.f32 %v238, 0.0
    %v240 = vstv %s81
    %v241 = vmul.f32 %v240, %v239
    %v242 = vadd.f32 %v228, %v241
    %v243 = vstv %s82
    %v244 = vmul.f32 %v243, %v239
    %v245 = vadd.f32 %v231, %v244
    %v246 = vstv %s53
    %v247 = vmul.f32 %v246, %v147
    %v248 = vstv %s54
    %v249 = vmul.f32 %v248, %v149
    %v250 = vadd.f32 %v247, %v249
    %v251 = vstv %s66
    %v252 = vadd.f32 %v250, %v251
    %v253 = vmax.f32 %v252, 0.0
    %v254 = vstv %s83
    %v255 = vmul.f32 %v254, %v253
    %v256 = vadd.f32 %v242, %v255
    %v257 = vstv %s84
    %v258 = vmul.f32 %v257, %v253
    %v259 = vadd.f32 %v245, %v258
    %v260 = vstv %s55
    %v261 = vmul.f32 %v260, %v147
    %v262 = vstv %s56
    %v263 = vmul.f32 %v262, %v149
    %v264 = vadd.f32 %v261, %v263
    %v265 = vstv %s67
    %v266 = vadd.f32 %v264, %v265
    %v267 = vmax.f32 %v266, 0.0
    %v268 = vstv %s85
    %v269 = vmul.f32 %v268, %v267
    %v270 = vadd.f32 %v256, %v269
    %v271 = vstv %s86
    %v272 = vmul.f32 %v271, %v267
    %v273 = vadd.f32 %v259, %v272
    %v274 = vstv %s57
    %v275 = vmul.f32 %v274, %v147
    %v276 = vstv %s58
    %v277 = vmul.f32 %v276, %v149
    %v278 = vadd.f32 %v275, %v277
    %v279 = vstv %s68
    %v280 = vadd.f32 %v278, %v279
    %v281 = vmax.f32 %v280, 0.0
    %v282 = vstv %s87
    %v283 = vmul.f32 %v282, %v281
    %v284 = vadd.f32 %v270, %v283
    %v285 = vstv %s88
    %v286 = vmul.f32 %v285, %v281
    %v287 = vadd.f32 %v273, %v286
    %v288 = vstv %s89
    %v289 = vadd.f32 %v284, %v288
    %v290 = vstv %s90
    %v291 = vadd.f32 %v287, %v290
    %v292 = vstv %s91
    %v293 = vmul.f32 %v292, %v289
    %v294 = vstv %s92
    %v295 = vmul.f32 %v294, %v291
    %v296 = vadd.f32 %v293, %v295
    %v297 = vstv %s111
    %v298 = vadd.f32 %v296, %v297
    %v299 = vmax.f32 %v298, 0.0
    %v300 = vstv %s121
    %v301 = vmul.f32 %v300, %v299
    %v302 = vstv %s122
    %v303 = vmul.f32 %v302, %v299
    %v304 = vstv %s93
    %v305 = vmul.f32 %v304, %v289
    %v306 = vstv %s94
    %v307 = vmul.f32 %v306, %v291
    %v308 = vadd.f32 %v305, %v307
    %v309 = vstv %s112
    %v310 = vadd.f32 %v308, %v309
    %v311 = vmax.f32 %v310, 0.0
    %v312 = vstv %s123
    %v313 = vmul.f32 %v312, %v311
    %v314 = vadd.f32 %v301, %v313
    %v315 = vstv %s124
    %v316 = vmul.f32 %v315, %v311
    %v317 = vadd.f32 %v303, %v316
    %v318 = vstv %s95
    %v319 = vmul.f32 %v318, %v289
    %v320 = vstv %s96
    %v321 = vmul.f32 %v320, %v291
    %v322 = vadd.f32 %v319, %v321
    %v323 = vstv %s113
    %v324 = vadd.f32 %v322, %v323
    %v325 = vmax.f32 %v324, 0.0
    %v326 = vstv %s125
    %v327 = vmul.f32 %v326, %v325
    %v328 = vadd.f32 %v314, %v327
    %v329 = vstv %s126
    %v330 = vmul.f32 %v329, %v325
    %v331 = vadd.f32 %v317, %v330
    %v332 = vstv %s97
    %v333 = vmul.f32 %v332, %v289
    %v334 = vstv %s98
    %v335 = vmul.f32 %v334, %v291
    %v336 = vadd.f32 %v333, %v335
    %v337 = vstv %s114
    %v338 = vadd.f32 %v336, %v337
    %v339 = vmax.f32 %v338, 0.0
    %v340 = vstv %s127
    %v341 = vmul.f32 %v340, %v339
    %v342 = vadd.f32 %v328, %v341
    %v343 = vstv %s128
    %v344 = vmul.f32 %v343, %v339
    %v345 = vadd.f32 %v331, %v344
    %v346 = vstv %s99
    %v347 = vmul.f32 %v346, %v289
    %v348 = vstv %s100
    %v349 = vmul.f32 %v348, %v291
    %v350 = vadd.f32 %v347, %v349
    %v351 = vstv %s115
    %v352 = vadd.f32 %v350, %v351
    %v353 = vmax.f32 %v352, 0.0
    %v354 = vstv %s129
    %v355 = vmul.f32 %v354, %v353
    %v356 = vadd.f32 %v342, %v355
    %v357 = vstv %s130
    %v358 = vmul.f32 %v357, %v353
    %v359 = vadd.f32 %v345, %v358
    %v360 = vstv %s101
    %v361 = vmul.f32 %v360, %v289
    %v362 = vstv %s102
    %v363 = vmul.f32 %v362, %v291
    %v364 = vadd.f32 %v361, %v363
    %v365 = vstv %s116
    %v366 = vadd.f32 %v364, %v365
    %v367 = vmax.f32 %v366, 0.0
    %v368 = vstv %s131
    %v369 = vmul.f32 %v368, %v367
    %v370 = vadd.f32 %v356, %v369
    %v371 = vstv %s132
    %v372 = vmul.f32 %v371, %v367
    %v373 = vadd.f32 %v359, %v372
    %v374 = vstv %s103
    %v375 = vmul.f32 %v374, %v289
    %v376 = vstv %s104
    %v377 = vmul.f32 %v376, %v291
    %v378 = vadd.f32 %v375, %v377
    %v379 = vstv %s117
    %v380 = vadd.f32 %v378, %v379
    %v381 = vmax.f32 %v380, 0.0
    %v382 = vstv %s133
    %v383 = vmul.f32 %v382, %v381
    %v384 = vadd.f32 %v370, %v383
    %v385 = vstv %s134
    %v386 = vmul.f32 %v385, %v381
    %v387 = vadd.f32 %v373, %v386
    %v388 = vstv %s105
    %v389 = vmul.f32 %v388, %v289
    %v390 = vstv %s106
    %v391 = vmul.f32 %v390, %v291
    %v392 = vadd.f32 %v389, %v391
    %v393 = vstv %s118
    %v394 = vadd.f32 %v392, %v393
    %v395 = vmax.f32 %v394, 0.0
    %v396 = vstv %s135
    %v397 = vmul.f32 %v396, %v395
    %v398 = vadd.f32 %v384, %v397
    %v399 = vstv %s136
    %v400 = vmul.f32 %v399, %v395
    %v401 = vadd.f32 %v387, %v400
    %v402 = vstv %s107
    %v403 = vmul.f32 %v402, %v289
    %v404 = vstv %s108
    %v405 = vmul.f32 %v404, %v291
    %v406 = vadd.f32 %v403, %v405
    %v407 = vstv %s119
    %v408 = vadd.f32 %v406, %v407
    %v409 = vmax.f32 %v408, 0.0
    %v410 = vstv %s137
    %v411 = vmul.f32 %v410, %v409
    %v412 = vadd.f32 %v398, %v411
    %v413 = vstv %s138
    %v414 = vmul.f32 %v413, %v409
    %v415 = vadd.f32 %v401, %v414
    %v416 = vstv %s109
    %v417 = vmul.f32 %v416, %v289
    %v418 = vstv %s110
    %v419 = vmul.f32 %v418, %v291
    %v420 = vadd.f32 %v417, %v419
    %v421 = vstv %s120
    %v422 = vadd.f32 %v420, %v421
    %v423 = vmax.f32 %v422, 0.0
    %v424 = vstv %s139
    %v425 = vmul.f32 %v424, %v423
    %v426 = vadd.f32 %v412, %v425
    %v427 = vstv %s140
    %v428 = vmul.f32 %v427, %v423
    %v429 = vadd.f32 %v415, %v428
    %v430 = vstv %s141
    %v431 = vadd.f32 %v426, %v430
    %v432 = vstv %s142
    %v433 = vadd.f32 %v429, %v432
    %v434 = vmul.f32 %v431, %v431
    %v435 = vmul.f32 %v433, %v433
    %v436 = vadd.f32 %v434, %v435
    %v437 = vmax.f32 %v436, 1e-24
    %v438 = vrsqrt.pop %v437
    %v439 = vmul.f32 %v438, %v437
    %v440 = vmul.f32 %v439, %v438
    %v441 = vmul.f32 0.5, %v440
    %v442 = vsub.f32 1.5, %v441
    %v443 = vmul.f32 %v438, %v442
    %vm444 = vweird.f32 %v437
    %vm445 = vweird.f32 %v438
    %vm446 = vmor %vm444, %vm445
    %v447 = vsel %vm446, %v438, %v443
    %v448 = vmul.f32 %v431, %v447
    %v449 = vmul.f32 %v433, %v447
    %450 = vrot.lane.b32.xlu0 %v449, 1
    %v451 = vpop.permute.xlu0 %450
    %v452 = vsel %vm146, %v448, %v451
    %453 = vst [vmem:[#allocation7] sm:$0xff] %v452
    // Predicated region
    $region18: #{tpu_custom_call.1} parent=1 // pred_check
      _
    $region19: #{tpu_custom_call.1} parent=1 // pred_check_branch
      %455 = sbr.rel (0) target = $region21
    $region20: #{tpu_custom_call.1} parent=1 // pred_region
      %457 = vsyncadd [#allocation4], 0
      %s459 = sshll.u32 [#allocation7], 4
      %s460 = int_to_ptr.vmem [resolvable:$true] %s459
      %s461 = sshll.u32 %s2, 4
      %s462 = int_to_ptr.hbm [resolvable:$true] %s461
      %464 = dma.vmem_to_hbm [thread:$0]  %s460, 128, %s462, [#allocation4]
    $region21: #{tpu_custom_call.1} parent=1 // pred_fallthru
      _
    // Predicated region
    $region22: #{tpu_custom_call.1} parent=1 // pred_check
      _
    $region23: #{tpu_custom_call.1} parent=1 // pred_check_branch
      %466 = sbr.rel (0) target = $region25
    $region24: #{tpu_custom_call.1} parent=1 // pred_region
      %468 = dma.done [#allocation4], 128
    $region25: #{tpu_custom_call.1} parent=1 // pred_fallthru
      _
    %469 = vsyncpa [#allocation3], 1
    %470 = vsyncpa [#allocation4], 1
    %471 = vsyncpa [#allocation5], 1

</llo_original>
